<compile_context>
chip_gen: v7x
topology: tpu7x:2x2x1
jax: 0.10.0
libtpu: 0.0.40
codegen_flags: <defaults>
</compile_context>

<pallas_src>
import jax
import jax.numpy as jnp
from jax.experimental import pallas as pl
from jax.experimental.pallas import tpu as pltpu


def se_block_kernel(xse_ref, w1_ref, b1_ref, w2_ref, x_ref, o_ref):
    # xse: [1,40]  f32     (squeeze tensor)
    # w1 : [40,640] bf16   (conv2d37 weight, pre-transposed)
    # b1 : [1,640] f32     (conv2d37 bias)
    # w2 : [160,640] bf16  (conv2d38 weight)
    # x  : [640,196] f32   (feature map, channel-major)
    # o  : [160,196] bf16
    # conv2d37 (1x1 + bias): bf16 MXU matmul, f32 accumulate, f32 gate math.
    se = jnp.dot(xse_ref[...].astype(jnp.bfloat16), w1_ref[...],
                 preferred_element_type=jnp.float32) + b1_ref[...]
    gate = jax.nn.sigmoid(se)                                   # [1,640] f32
    # Fold the gate into the w2 rows, staying in bf16 (sublane-broadcast of a
    # lane-dense [1,640] gate; no [160,640] f32 intermediate, single rounding).
    w2_scaled = w2_ref[...] * gate.astype(jnp.bfloat16)          # [160,640] bf16
    # Feature-map bf16 cast happens here (not in the wrapper).
    x_bf16 = x_ref[...].astype(jnp.bfloat16)                     # [640,196]
    # conv2d38 (1x1, no bias): [160,640] @ [640,196], f32 accumulate -> bf16 out.
    o_ref[...] = jnp.dot(w2_scaled, x_bf16,
                         preferred_element_type=jnp.float32).astype(o_ref.dtype)


def prepare_se_weights(w1, b1, w2):
    """One-time weight preprocessing, hoisted OUT of the per-call path.

    w1: [640, 40, 1, 1] f32, b1: [640] f32, w2: [160, 640, 1, 1] f32.
    Returns (w1m [40,640] bf16, b1m [1,640] f32, w2m [160,640] bf16)."""
    C_mid, C_se = w1.shape[0], w1.shape[1]    # 640, 40
    C_out = w2.shape[0]                       # 160
    w1m = jnp.asarray(w1).reshape(C_mid, C_se).T.astype(jnp.bfloat16)   # [40,640]
    b1m = jnp.asarray(b1).reshape(1, C_mid).astype(jnp.float32)          # [1,640]
    w2m = jnp.asarray(w2).reshape(C_out, C_mid).astype(jnp.bfloat16)     # [160,640]
    return w1m, b1m, w2m


def se_block(x120, x123, w1m, b1m, w2m):
    """x120: [1, C_mid, H, W] NCHW f32, x123: [1, C_se, 1, 1] f32,
    w1m/b1m/w2m: outputs of prepare_se_weights().
    Returns [1, C_out, H, W] NCHW (bfloat16)."""
    N, C_mid, H, W = x120.shape
    assert N == 1, "kernel written for batch 1 (as in the reference module)"
    C_se = w1m.shape[0]       # 40
    C_out = w2m.shape[0]      # 160
    HW = H * W

    # Pure reshapes (row-major contiguous) — no transposes, no dtype converts.
    x_cm = x120.reshape(C_mid, HW)            # [640, 196] f32
    x_se = x123.reshape(1, C_se)              # [1, 40]    f32

    flops = 2 * C_out * C_mid * HW + 2 * C_se * C_mid + C_out * C_mid
    bytes_accessed = (
        x_cm.size * 4            # feature map in, f32
        + w2m.size * 2           # w2 bf16
        + w1m.size * 2           # w1 bf16
        + b1m.size * 4 + x_se.size * 4
        + C_out * HW * 2         # bf16 output
    )
    cost = pl.CostEstimate(flops=flops, transcendentals=C_mid,
                           bytes_accessed=bytes_accessed)

    out_cm = pl.pallas_call(
        se_block_kernel,
        out_shape=jax.ShapeDtypeStruct((C_out, HW), jnp.bfloat16),
        in_specs=[
            pl.BlockSpec(memory_space=pltpu.MemorySpace.VMEM),  # x_se
            pl.BlockSpec(memory_space=pltpu.MemorySpace.VMEM),  # w1
            pl.BlockSpec(memory_space=pltpu.MemorySpace.VMEM),  # b1
            pl.BlockSpec(memory_space=pltpu.MemorySpace.VMEM),  # w2
            pl.BlockSpec(memory_space=pltpu.MemorySpace.VMEM),  # x (feature map)
        ],
        out_specs=pl.BlockSpec(memory_space=pltpu.MemorySpace.VMEM),
        cost_estimate=cost,
    )(x_se, w1m, b1m, w2m, x_cm)

    # [160, 196] -> [1, 160, 14, 14]: pure reshape, no transpose.
    return out_cm.reshape(1, C_out, H, W)


def reference(x120, x123, w1, b1, w2):
    """Pure-JAX f32 reference of the PyTorch forward (1x1 convs as einsums)."""
    x124 = jnp.einsum("nchw,oc->nohw", x123, w1.reshape(w1.shape[0], -1)) \
        + b1[None, :, None, None]
    x125 = jax.nn.sigmoid(x124)
    x126 = x125 * x120
    x127 = jnp.einsum("nchw,oc->nohw", x126, w2.reshape(w2.shape[0], -1))
    return x127


if __name__ == "__main__":
    key = jax.random.PRNGKey(0)
    k1, k2, k3, k4, k5 = jax.random.split(key, 5)

    # Shapes implied by the module's forward pass (already small: ~0.5 MB).
    x120 = jax.random.normal(k1, (1, 640, 14, 14), dtype=jnp.float32)
    x123 = jax.random.normal(k2, (1, 40, 1, 1), dtype=jnp.float32)

    # conv2d37: 40->640 with bias; conv2d38: 640->160 no bias.
    w1 = jax.random.normal(k3, (640, 40, 1, 1), dtype=jnp.float32) * 0.05
    b1 = jax.random.normal(k4, (640,), dtype=jnp.float32) * 0.05
    w2 = jax.random.normal(k5, (160, 640, 1, 1), dtype=jnp.float32) * 0.05

    # One-time weight prep (outside the per-call path).
    w1m, b1m, w2m = prepare_se_weights(w1, b1, w2)
    w1m, b1m, w2m = jax.block_until_ready((w1m, b1m, w2m))

    run = jax.jit(se_block)
    out = jax.block_until_ready(run(x120, x123, w1m, b1m, w2m))
    ref = jax.block_until_ready(reference(x120, x123, w1, b1, w2))

    assert out.shape == (1, 160, 14, 14), out.shape
    assert out.dtype == jnp.bfloat16, out.dtype
    # Tolerance accounts for bf16 feature-map / weights / output (f32 accumulate).
    assert jnp.allclose(out.astype(jnp.float32), ref, atol=3e-2, rtol=3e-2), \
        "mismatch vs reference"
    print("KERNEL_OK")
</pallas_src>

<mosaic_0001>
module attributes {stable_mosaic.version = 11 : i64} {
  func.func @se_block_kernel(%arg0: memref<1x40xf32, #tpu.memory_space<vmem>>, %arg1: memref<40x640xbf16, #tpu.memory_space<vmem>>, %arg2: memref<1x640xf32, #tpu.memory_space<vmem>>, %arg3: memref<160x640xbf16, #tpu.memory_space<vmem>>, %arg4: memref<640x196xf32, #tpu.memory_space<vmem>>, %arg5: memref<160x196xbf16, #tpu.memory_space<vmem>>) attributes {dimension_semantics = [], scalar_prefetch = 0 : i64, scratch_operands = 0 : i64, tpu.core_type = #tpu.core_type<tc>} {
    %c0 = arith.constant 0 : index
    %c0_0 = arith.constant 0 : index
    %0 = vector.load %arg0[%c0, %c0_0] : memref<1x40xf32, #tpu.memory_space<vmem>>, vector<1x40xf32>
    %1 = arith.truncf %0 : vector<1x40xf32> to vector<1x40xbf16>
    %c0_1 = arith.constant 0 : index
    %c0_2 = arith.constant 0 : index
    %2 = vector.load %arg1[%c0_1, %c0_2] : memref<40x640xbf16, #tpu.memory_space<vmem>>, vector<40x640xbf16>
    %cst = arith.constant dense<0.000000e+00> : vector<1x640xf32>
    %3 = tpu.matmul %1, %2, %cst {dimension_numbers = #tpu.dot_dimension_numbers<[1], [0], [0], [1], [0, 0, 1, 1], [], []>} : vector<1x40xbf16>, vector<40x640xbf16>, vector<1x640xf32> -> vector<1x640xf32>
    %c0_3 = arith.constant 0 : index
    %c0_4 = arith.constant 0 : index
    %4 = vector.load %arg2[%c0_3, %c0_4] : memref<1x640xf32, #tpu.memory_space<vmem>>, vector<1x640xf32>
    %5 = arith.addf %3, %4 : vector<1x640xf32>
    %6 = arith.negf %5 : vector<1x640xf32>
    %7 = math.exp %6 : vector<1x640xf32>
    %cst_5 = arith.constant 1.000000e+00 : f32
    %8 = vector.broadcast %cst_5 : f32 to vector<1x640xf32>
    %9 = arith.addf %8, %7 : vector<1x640xf32>
    %10 = arith.divf %8, %9 : vector<1x640xf32>
    %c0_6 = arith.constant 0 : index
    %c0_7 = arith.constant 0 : index
    %11 = vector.load %arg3[%c0_6, %c0_7] : memref<160x640xbf16, #tpu.memory_space<vmem>>, vector<160x640xbf16>
    %12 = arith.truncf %10 : vector<1x640xf32> to vector<1x640xbf16>
    %13 = vector.broadcast %12 : vector<1x640xbf16> to vector<160x640xbf16>
    %14 = arith.mulf %11, %13 : vector<160x640xbf16>
    %c0_8 = arith.constant 0 : index
    %c0_9 = arith.constant 0 : index
    %15 = vector.load %arg4[%c0_8, %c0_9] : memref<640x196xf32, #tpu.memory_space<vmem>>, vector<640x196xf32>
    %16 = arith.truncf %15 : vector<640x196xf32> to vector<640x196xbf16>
    %cst_10 = arith.constant dense<0.000000e+00> : vector<160x196xf32>
    %17 = tpu.matmul %14, %16, %cst_10 {dimension_numbers = #tpu.dot_dimension_numbers<[1], [0], [0], [1], [0, 0, 1, 1], [], []>} : vector<160x640xbf16>, vector<640x196xbf16>, vector<160x196xf32> -> vector<160x196xf32>
    %18 = arith.truncf %17 : vector<160x196xf32> to vector<160x196xbf16>
    %c0_11 = arith.constant 0 : index
    %c0_12 = arith.constant 0 : index
    %19 = vector.load %arg5[%c0_11, %c0_12] : memref<160x196xbf16, #tpu.memory_space<vmem>>, vector<160x196xbf16>
    tpu.vector_store %arg5[%c0_11, %c0_12], %18 {strides = array<i32>} : memref<160x196xbf16, #tpu.memory_space<vmem>>, vector<160x196xbf16>,
    return
  }
}

</mosaic_0001>

<llo_original>
// kernel: se_block.1
$region0: #{se_block.1}
  #allocation0 [shape = 'u32[]', space=smem, size = 0x4, offset = 0x4, fixed_abs, tag = 'smem constant byte address 0x4 - core index']
  #allocation1 [shape = 'u32[144,128]{1,0:T(1,128)}', space=vmem, size = 0x12000, scoped, tag = 'internal scratch']
  %s0 = inlined_call_operand.vmem [shape: f32[1,40], index: 0, kind: input, shape index: {}]
  %s1 = inlined_call_operand.vmem [shape: bf16[40,640], index: 1, kind: input, shape index: {}]
  %s2 = inlined_call_operand.vmem [shape: f32[1,640], index: 2, kind: input, shape index: {}]
  %s3 = inlined_call_operand.vmem [shape: bf16[160,640], index: 3, kind: input, shape index: {}]
  %s4 = inlined_call_operand.vmem [shape: f32[640,196], index: 4, kind: input, shape index: {}]
  %s5 = inlined_call_operand.vmem [shape: bf16[160,196], index: 5, kind: output, shape index: {}]
  %s6 = sld [smem:[#allocation0]]
  $region30: #{se_block.1} parent=0
    _
  %s8 = ssub.s32 1, %s6
  %s9 = scalar_select 0, %s8, %s6
  // Predicated region
  $region2: #{se_block.1} parent=0 // pred_check
    _
  $region3: #{se_block.1} parent=0 // pred_check_branch
    %11 = sbr.rel (0) target = $region5
  $region4: #{se_block.1} parent=0 // pred_region
    _
  $region5: #{se_block.1} parent=0 // pred_fallthru
    _
  // Predicated region
  $region6: #{se_block.1} parent=0 // pred_check
    _
  $region7: #{se_block.1} parent=0 // pred_check_branch
    %13 = sbr.rel (0) target = $region9
  $region8: #{se_block.1} parent=0 // pred_region
    _
  $region9: #{se_block.1} parent=0 // pred_fallthru
    _
  // Predicated region
  $region10: #{se_block.1} parent=0 // pred_check
    _
  $region11: #{se_block.1} parent=0 // pred_check_branch
    %15 = sbr.rel (0) target = $region13
  $region12: #{se_block.1} parent=0 // pred_region
    _
  $region13: #{se_block.1} parent=0 // pred_fallthru
    _
  // Predicated region
  $region14: #{se_block.1} parent=0 // pred_check
    _
  $region15: #{se_block.1} parent=0 // pred_check_branch
    %17 = sbr.rel (0) target = $region17
  $region16: #{se_block.1} parent=0 // pred_region
    _
  $region17: #{se_block.1} parent=0 // pred_fallthru
    _
  // Predicated region
  $region18: #{se_block.1} parent=0 // pred_check
    _
  $region19: #{se_block.1} parent=0 // pred_check_branch
    %19 = sbr.rel (0) target = $region21
  $region20: #{se_block.1} parent=0 // pred_region
    _
  $region21: #{se_block.1} parent=0 // pred_fallthru
    _
  %v21 = vld [vmem:[%s0] sm:$0x1]
  %v22 = vpack.c.bf16 %v21, %v21
  %v23 = vld [vmem:[%s1] sm:$0xff]
  %v24 = vld [vmem:[%s1 + $0x8] sm:$0xff]
  %v25 = vld [vmem:[%s1 + $0x10] sm:$0xf]
  %v26 = vld [vmem:[%s1 + $0x14] sm:$0xff]
  %v27 = vld [vmem:[%s1 + $0x1c] sm:$0xff]
  %v28 = vld [vmem:[%s1 + $0x24] sm:$0xf]
  %v29 = vld [vmem:[%s1 + $0x28] sm:$0xff]
  %v30 = vld [vmem:[%s1 + $0x30] sm:$0xff]
  %v31 = vld [vmem:[%s1 + $0x38] sm:$0xf]
  %v32 = vld [vmem:[%s1 + $0x3c] sm:$0xff]
  %v33 = vld [vmem:[%s1 + $0x44] sm:$0xff]
  %v34 = vld [vmem:[%s1 + $0x4c] sm:$0xf]
  %v35 = vld [vmem:[%s1 + $0x50] sm:$0xff]
  %v36 = vld [vmem:[%s1 + $0x58] sm:$0xff]
  %v37 = vld [vmem:[%s1 + $0x60] sm:$0xf]
  %v38 = vld [vmem:[%s2] sm:$0x1f]
  %v54 = vunpack.c.l.b16 %v23
  %v55 = vunpack.c.h.b16 %v23
  %v56 = vunpack.c.l.b16 %v24
  %v57 = vunpack.c.h.b16 %v24
  %v58 = vunpack.c.l.b16 %v25
  %v59 = vunpack.c.l.b16 %v26
  %v60 = vunpack.c.h.b16 %v26
  %v61 = vunpack.c.l.b16 %v27
  %v62 = vunpack.c.h.b16 %v27
  %v63 = vunpack.c.l.b16 %v28
  %v64 = vunpack.c.l.b16 %v29
  %v65 = vunpack.c.h.b16 %v29
  %v66 = vunpack.c.l.b16 %v30
  %v67 = vunpack.c.h.b16 %v30
  %v68 = vunpack.c.l.b16 %v31
  %v69 = vunpack.c.l.b16 %v32
  %v70 = vunpack.c.h.b16 %v32
  %v71 = vunpack.c.l.b16 %v33
  %v72 = vunpack.c.h.b16 %v33
  %v73 = vunpack.c.l.b16 %v34
  %v74 = vunpack.c.l.b16 %v35
  %v75 = vunpack.c.h.b16 %v35
  %v76 = vunpack.c.l.b16 %v36
  %v77 = vunpack.c.h.b16 %v36
  %v78 = vunpack.c.l.b16 %v37
  %v79 = vpack.c.b16 %v59, %v54
  %v80 = vpack.c.b16 %v60, %v55
  %v81 = vpack.c.b16 %v61, %v56
  %v82 = vpack.c.b16 %v62, %v57
  %v83 = vpack.c.b16 %v63, %v58
  %v84 = vpack.c.b16 %v69, %v64
  %v85 = vpack.c.b16 %v70, %v65
  %v86 = vpack.c.b16 %v71, %v66
  %v87 = vpack.c.b16 %v72, %v67
  %v88 = vpack.c.b16 %v73, %v68
  %v89 = vpack.c.b16 %v74, %v74
  %v90 = vpack.c.b16 %v75, %v75
  %v91 = vpack.c.b16 %v76, %v76
  %v92 = vpack.c.b16 %v77, %v77
  %v93 = vpack.c.b16 %v78, %v78
  %v105 = vlaneseq
  %v106 = vshrl.u32 %v105, 7
  %v107 = vsub.s32 0, %v106
  %v108 = vrot.slane %v38, %v107
  %v109 = vlaneseq
  %v110 = vshrl.u32 %v109, 7
  %v111 = vsub.s32 1, %v110
  %v112 = vrot.slane %v38, %v111
  %v113 = vlaneseq
  %v114 = vshrl.u32 %v113, 7
  %v115 = vsub.s32 2, %v114
  %v116 = vrot.slane %v38, %v115
  %v117 = vlaneseq
  %v118 = vshrl.u32 %v117, 7
  %v119 = vsub.s32 3, %v118
  %v120 = vrot.slane %v38, %v119
  %v121 = vlaneseq
  %v122 = vshrl.u32 %v121, 7
  %v123 = vsub.s32 4, %v122
  %v124 = vrot.slane %v38, %v123
  %vm130 = vcmask 326656
  %v132 = vsel %vm130, %v22, 0
  %vm134 = vcmask 1043456
  %v136 = vsel %vm134, %v89, 0
  %v139 = vsel %vm134, %v90, 0
  %v142 = vsel %vm134, %v91, 0
  %v145 = vsel %vm134, %v92, 0
  %v148 = vsel %vm134, %v93, 0
  %150 = vmatprep.subr.bf16.mxu0 %v80
  %151 = vmatpush1.bf16.msra.mxu0 %v79
  %152 = vmatprep.subr.bf16.mxu0 %v85
  %153 = vmatpush1.bf16.msra.mxu0 %v84
  %154 = vmatprep.subr.bf16.mxu0 %v139
  %155 = vmatpush1.bf16.msra.mxu0 %v136
  %156 = vmatprep.subr.bf16.mxu0 0
  %157 = vmatpush1.bf16.msra.mxu0 0
  %158 = vmatprep.subr.bf16.mxu0 0
  %159 = vmatpush1.bf16.msra.mxu0 0
  %160 = vmatprep.subr.bf16.mxu0 0
  %161 = vmatpush1.bf16.msra.mxu0 0
  %162 = vmatprep.subr.bf16.mxu0 0
  %163 = vmatpush1.bf16.msra.mxu0 0
  %164 = vmatprep.subr.bf16.mxu0 0
  %165 = vmatpush1.bf16.msra.mxu0 0
  %166 = vmatprep.subr.bf16.mxu0 0
  %167 = vmatpush1.bf16.msra.mxu0 0
  %168 = vmatprep.subr.bf16.mxu0 0
  %169 = vmatpush1.bf16.msra.mxu0 0
  %170 = vmatprep.subr.bf16.mxu0 0
  %171 = vmatpush1.bf16.msra.mxu0 0
  %172 = vmatprep.subr.bf16.mxu0 0
  %173 = vmatpush1.bf16.msra.mxu0 0
  %174 = vmatprep.subr.bf16.mxu0 0
  %175 = vmatpush1.bf16.msra.mxu0 0
  %176 = vmatprep.subr.bf16.mxu0 0
  %177 = vmatpush1.bf16.msra.mxu0 0
  %178 = vmatprep.subr.bf16.mxu0 0
  %179 = vmatpush1.bf16.msra.mxu0 0
  %180 = vmatprep.subr.bf16.mxu0 0
  %181 = vmatpush1.bf16.msra.mxu0 0
  %182 = vmatprep.mubr.bf16.mxu0 0
  %183 = vmatmul.mubr.bf16.gmra.mrb[0].mxu0 %v132
  %v184 = vpop.f32.mrb[0].mxu0
  %v185 = vadd.f32 %v108, %v184
  %v186 = vpop.f32.mrb[0].mxu0
  %v187 = vadd.f32 %v112, %v186
  %v188 = vpop.f32.mrb[0].mxu0
  %v189 = vpop.f32.mrb[0].mxu0
  %190 = vdwg.mxu0
  %191 = vmatprep.subr.bf16.mxu0 %v82
  %192 = vmatpush1.bf16.msra.mxu0 %v81
  %193 = vmatprep.subr.bf16.mxu0 %v87
  %194 = vmatpush1.bf16.msra.mxu0 %v86
  %195 = vmatprep.subr.bf16.mxu0 %v145
  %196 = vmatpush1.bf16.msra.mxu0 %v142
  %197 = vmatprep.subr.bf16.mxu0 0
  %198 = vmatpush1.bf16.msra.mxu0 0
  %199 = vmatprep.subr.bf16.mxu0 0
  %200 = vmatpush1.bf16.msra.mxu0 0
  %201 = vmatprep.subr.bf16.mxu0 0
  %202 = vmatpush1.bf16.msra.mxu0 0
  %203 = vmatprep.subr.bf16.mxu0 0
  %204 = vmatpush1.bf16.msra.mxu0 0
  %205 = vmatprep.subr.bf16.mxu0 0
  %206 = vmatpush1.bf16.msra.mxu0 0
  %207 = vmatprep.subr.bf16.mxu0 0
  %208 = vmatpush1.bf16.msra.mxu0 0
  %209 = vmatprep.subr.bf16.mxu0 0
  %210 = vmatpush1.bf16.msra.mxu0 0
  %211 = vmatprep.subr.bf16.mxu0 0
  %212 = vmatpush1.bf16.msra.mxu0 0
  %213 = vmatprep.subr.bf16.mxu0 0
  %214 = vmatpush1.bf16.msra.mxu0 0
  %215 = vmatprep.subr.bf16.mxu0 0
  %216 = vmatpush1.bf16.msra.mxu0 0
  %217 = vmatprep.subr.bf16.mxu0 0
  %218 = vmatpush1.bf16.msra.mxu0 0
  %219 = vmatprep.subr.bf16.mxu0 0
  %220 = vmatpush1.bf16.msra.mxu0 0
  %221 = vmatprep.subr.bf16.mxu0 0
  %222 = vmatpush1.bf16.msra.mxu0 0
  %223 = vmatprep.mubr.bf16.mxu0 0
  %224 = vmatmul.mubr.bf16.gmra.mrb[0].mxu0 %v132
  %v225 = vpop.f32.mrb[0].mxu0
  %v226 = vadd.f32 %v116, %v225
  %v227 = vpop.f32.mrb[0].mxu0
  %v228 = vadd.f32 %v120, %v227
  %v229 = vpop.f32.mrb[0].mxu0
  %v230 = vpop.f32.mrb[0].mxu0
  %231 = vdwg.mxu0
  %232 = vmatprep.subr.bf16.mxu0 0
  %233 = vmatpush1.bf16.msra.mxu0 %v83
  %234 = vmatprep.subr.bf16.mxu0 0
  %235 = vmatpush1.bf16.msra.mxu0 %v88
  %236 = vmatprep.subr.bf16.mxu0 0
  %237 = vmatpush1.bf16.msra.mxu0 %v148
  %238 = vmatprep.subr.bf16.mxu0 0
  %239 = vmatpush1.bf16.msra.mxu0 0
  %240 = vmatprep.subr.bf16.mxu0 0
  %241 = vmatpush1.bf16.msra.mxu0 0
  %242 = vmatprep.subr.bf16.mxu0 0
  %243 = vmatpush1.bf16.msra.mxu0 0
  %244 = vmatprep.subr.bf16.mxu0 0
  %245 = vmatpush1.bf16.msra.mxu0 0
  %246 = vmatprep.subr.bf16.mxu0 0
  %247 = vmatpush1.bf16.msra.mxu0 0
  %248 = vmatprep.subr.bf16.mxu0 0
  %249 = vmatpush1.bf16.msra.mxu0 0
  %250 = vmatprep.subr.bf16.mxu0 0
  %251 = vmatpush1.bf16.msra.mxu0 0
  %252 = vmatprep.subr.bf16.mxu0 0
  %253 = vmatpush1.bf16.msra.mxu0 0
  %254 = vmatprep.subr.bf16.mxu0 0
  %255 = vmatpush1.bf16.msra.mxu0 0
  %256 = vmatprep.subr.bf16.mxu0 0
  %257 = vmatpush1.bf16.msra.mxu0 0
  %258 = vmatprep.subr.bf16.mxu0 0
  %259 = vmatpush1.bf16.msra.mxu0 0
  %260 = vmatprep.subr.bf16.mxu0 0
  %261 = vmatpush1.bf16.msra.mxu0 0
  %262 = vmatprep.subr.bf16.mxu0 0
  %263 = vmatpush1.bf16.msra.mxu0 0
  %264 = vmatprep.mubr.bf16.mxu0 0
  %265 = vmatmul.mubr.bf16.gmra.mrb[0].mxu0 %v132
  %v266 = vpop.f32.mrb[0].mxu0
  %v267 = vadd.f32 %v124, %v266
  %v268 = vpop.f32.mrb[0].mxu0
  %v269 = vpop.f32.mrb[0].mxu0
  %v270 = vpop.f32.mrb[0].mxu0
  %271 = vdwg.mxu0
  %v272 = vxor.u32 %v185, 2147483648
  %v273 = vxor.u32 %v187, 2147483648
  %v274 = vxor.u32 %v226, 2147483648
  %v275 = vxor.u32 %v228, 2147483648
  %v276 = vxor.u32 %v267, 2147483648
  %v277 = vmul.f32 %v272, 1.442695
  %v278 = vpow.pop %v277
  %v279 = vmul.f32 %v273, 1.442695
  %v280 = vpow.pop %v279
  %v281 = vmul.f32 %v274, 1.442695
  %v282 = vpow.pop %v281
  %v283 = vmul.f32 %v275, 1.442695
  %v284 = vpow.pop %v283
  %v285 = vmul.f32 %v276, 1.442695
  %v286 = vpow.pop %v285
  %v287 = vadd.f32 %v278, 1.0
  %v288 = vadd.f32 %v280, 1.0
  %v289 = vadd.f32 %v282, 1.0
  %v290 = vadd.f32 %v284, 1.0
  %v291 = vadd.f32 %v286, 1.0
  %v292 = vrcp.pop %v287
  %v293 = vmul.f32 1.0, %v292
  %v294 = vrcp.pop %v288
  %v295 = vmul.f32 1.0, %v294
  %v296 = vrcp.pop %v289
  %v297 = vmul.f32 1.0, %v296
  %v298 = vrcp.pop %v290
  %v299 = vmul.f32 1.0, %v298
  %v300 = vrcp.pop %v291
  %v301 = vmul.f32 1.0, %v300
  %v302 = vld [vmem:[%s3] sm:$0xff]
  %v303 = vld [vmem:[%s3 + $0x8] sm:$0xff]
  %v304 = vld [vmem:[%s3 + $0x10] sm:$0xf]
  %v305 = vld [vmem:[%s3 + $0x14] sm:$0xff]
  %v306 = vld [vmem:[%s3 + $0x1c] sm:$0xff]
  %v307 = vld [vmem:[%s3 + $0x24] sm:$0xf]
  %v308 = vld [vmem:[%s3 + $0x28] sm:$0xff]
  %v309 = vld [vmem:[%s3 + $0x30] sm:$0xff]
  %v310 = vld [vmem:[%s3 + $0x38] sm:$0xf]
  %v311 = vld [vmem:[%s3 + $0x3c] sm:$0xff]
  %v312 = vld [vmem:[%s3 + $0x44] sm:$0xff]
  %v313 = vld [vmem:[%s3 + $0x4c] sm:$0xf]
  %v314 = vld [vmem:[%s3 + $0x50] sm:$0xff]
  %v315 = vld [vmem:[%s3 + $0x58] sm:$0xff]
  %v316 = vld [vmem:[%s3 + $0x60] sm:$0xf]
  %v317 = vld [vmem:[%s3 + $0x64] sm:$0xff]
  %v318 = vld [vmem:[%s3 + $0x6c] sm:$0xff]
  %v319 = vld [vmem:[%s3 + $0x74] sm:$0xf]
  %v320 = vld [vmem:[%s3 + $0x78] sm:$0xff]
  %v321 = vld [vmem:[%s3 + $0x80] sm:$0xff]
  %v322 = vld [vmem:[%s3 + $0x88] sm:$0xf]
  %v323 = vld [vmem:[%s3 + $0x8c] sm:$0xff]
  %v324 = vld [vmem:[%s3 + $0x94] sm:$0xff]
  %v325 = vld [vmem:[%s3 + $0x9c] sm:$0xf]
  %v326 = vld [vmem:[%s3 + $0xa0] sm:$0xff]
  %v327 = vld [vmem:[%s3 + $0xa8] sm:$0xff]
  %v328 = vld [vmem:[%s3 + $0xb0] sm:$0xf]
  %v329 = vld [vmem:[%s3 + $0xb4] sm:$0xff]
  %v330 = vld [vmem:[%s3 + $0xbc] sm:$0xff]
  %v331 = vld [vmem:[%s3 + $0xc4] sm:$0xf]
  %v332 = vld [vmem:[%s3 + $0xc8] sm:$0xff]
  %v333 = vld [vmem:[%s3 + $0xd0] sm:$0xff]
  %v334 = vld [vmem:[%s3 + $0xd8] sm:$0xf]
  %v335 = vld [vmem:[%s3 + $0xdc] sm:$0xff]
  %v336 = vld [vmem:[%s3 + $0xe4] sm:$0xff]
  %v337 = vld [vmem:[%s3 + $0xec] sm:$0xf]
  %v338 = vld [vmem:[%s3 + $0xf0] sm:$0xff]
  %v339 = vld [vmem:[%s3 + $0xf8] sm:$0xff]
  %v340 = vld [vmem:[%s3 + $0x100] sm:$0xf]
  %v341 = vld [vmem:[%s3 + $0x104] sm:$0xff]
  %v342 = vld [vmem:[%s3 + $0x10c] sm:$0xff]
  %v343 = vld [vmem:[%s3 + $0x114] sm:$0xf]
  %v344 = vld [vmem:[%s3 + $0x118] sm:$0xff]
  %v345 = vld [vmem:[%s3 + $0x120] sm:$0xff]
  %v346 = vld [vmem:[%s3 + $0x128] sm:$0xf]
  %v347 = vld [vmem:[%s3 + $0x12c] sm:$0xff]
  %v348 = vld [vmem:[%s3 + $0x134] sm:$0xff]
  %v349 = vld [vmem:[%s3 + $0x13c] sm:$0xf]
  %v350 = vld [vmem:[%s3 + $0x140] sm:$0xff]
  %v351 = vld [vmem:[%s3 + $0x148] sm:$0xff]
  %v352 = vld [vmem:[%s3 + $0x150] sm:$0xf]
  %v353 = vld [vmem:[%s3 + $0x154] sm:$0xff]
  %v354 = vld [vmem:[%s3 + $0x15c] sm:$0xff]
  %v355 = vld [vmem:[%s3 + $0x164] sm:$0xf]
  %v356 = vld [vmem:[%s3 + $0x168] sm:$0xff]
  %v357 = vld [vmem:[%s3 + $0x170] sm:$0xff]
  %v358 = vld [vmem:[%s3 + $0x178] sm:$0xf]
  %v359 = vld [vmem:[%s3 + $0x17c] sm:$0xff]
  %v360 = vld [vmem:[%s3 + $0x184] sm:$0xff]
  %v361 = vld [vmem:[%s3 + $0x18c] sm:$0xf]
  %v362 = vpack.c.bf16 %v293, %v293
  %v363 = vpack.c.bf16 %v295, %v295
  %v364 = vpack.c.bf16 %v297, %v297
  %v365 = vpack.c.bf16 %v299, %v299
  %v366 = vpack.c.bf16 %v301, %v301
  %v368 = vpack.i.b16 %v362, %v362
  %v370 = vlaneseq
  %v371 = vshrl.u32 %v370, 7
  %v372 = vsub.s32 0, %v371
  %v373 = vrot.slane %v368, %v372
  %v375 = vpack.i.b16 %v363, %v363
  %v377 = vlaneseq
  %v378 = vshrl.u32 %v377, 7
  %v379 = vsub.s32 0, %v378
  %v380 = vrot.slane %v375, %v379
  %v382 = vpack.i.b16 %v364, %v364
  %v384 = vlaneseq
  %v385 = vshrl.u32 %v384, 7
  %v386 = vsub.s32 0, %v385
  %v387 = vrot.slane %v382, %v386
  %v389 = vpack.i.b16 %v365, %v365
  %v391 = vlaneseq
  %v392 = vshrl.u32 %v391, 7
  %v393 = vsub.s32 0, %v392
  %v394 = vrot.slane %v389, %v393
  %v396 = vpack.i.b16 %v366, %v366
  %v398 = vlaneseq
  %v399 = vshrl.u32 %v398, 7
  %v400 = vsub.s32 0, %v399
  %v401 = vrot.slane %v396, %v400
  %v407 = vunpack.c.l.b16 %v373
  %v408 = vunpack.c.l.b16 %v380
  %v409 = vunpack.c.l.b16 %v387
  %v410 = vunpack.c.l.b16 %v394
  %v411 = vunpack.c.l.b16 %v401
  %v412 = vpack.c.b16 %v408, %v407
  %v413 = vpack.c.b16 %v410, %v409
  %v414 = vpack.c.b16 %v411, %v411
  %v418 = vmul.bf16 %v302, %v412
  %v419 = vmul.bf16 %v303, %v413
  %v420 = vmul.bf16 %v304, %v414
  %v421 = vmul.bf16 %v305, %v412
  %v422 = vmul.bf16 %v306, %v413
  %v423 = vmul.bf16 %v307, %v414
  %v424 = vmul.bf16 %v308, %v412
  %v425 = vmul.bf16 %v309, %v413
  %v426 = vmul.bf16 %v310, %v414
  %v427 = vmul.bf16 %v311, %v412
  %v428 = vmul.bf16 %v312, %v413
  %v429 = vmul.bf16 %v313, %v414
  %v430 = vmul.bf16 %v314, %v412
  %v431 = vmul.bf16 %v315, %v413
  %v432 = vmul.bf16 %v316, %v414
  %v433 = vmul.bf16 %v317, %v412
  %v434 = vmul.bf16 %v318, %v413
  %v435 = vmul.bf16 %v319, %v414
  %v436 = vmul.bf16 %v320, %v412
  %v437 = vmul.bf16 %v321, %v413
  %v438 = vmul.bf16 %v322, %v414
  %v439 = vmul.bf16 %v323, %v412
  %v440 = vmul.bf16 %v324, %v413
  %v441 = vmul.bf16 %v325, %v414
  %v442 = vmul.bf16 %v326, %v412
  %v443 = vmul.bf16 %v327, %v413
  %v444 = vmul.bf16 %v328, %v414
  %v445 = vmul.bf16 %v329, %v412
  %v446 = vmul.bf16 %v330, %v413
  %v447 = vmul.bf16 %v331, %v414
  %v448 = vmul.bf16 %v332, %v412
  %v449 = vmul.bf16 %v333, %v413
  %v450 = vmul.bf16 %v334, %v414
  %v451 = vmul.bf16 %v335, %v412
  %v452 = vmul.bf16 %v336, %v413
  %v453 = vmul.bf16 %v337, %v414
  %v454 = vmul.bf16 %v338, %v412
  %v455 = vmul.bf16 %v339, %v413
  %v456 = vmul.bf16 %v340, %v414
  %v457 = vmul.bf16 %v341, %v412
  %v458 = vmul.bf16 %v342, %v413
  %v459 = vmul.bf16 %v343, %v414
  %v460 = vmul.bf16 %v344, %v412
  %v461 = vmul.bf16 %v345, %v413
  %v462 = vmul.bf16 %v346, %v414
  %v463 = vmul.bf16 %v347, %v412
  %v464 = vmul.bf16 %v348, %v413
  %v465 = vmul.bf16 %v349, %v414
  %v466 = vmul.bf16 %v350, %v412
  %v467 = vmul.bf16 %v351, %v413
  %v468 = vmul.bf16 %v352, %v414
  %v469 = vmul.bf16 %v353, %v412
  %v470 = vmul.bf16 %v354, %v413
  %v471 = vmul.bf16 %v355, %v414
  %v472 = vmul.bf16 %v356, %v412
  %v473 = vmul.bf16 %v357, %v413
  %v474 = vmul.bf16 %v358, %v414
  %v475 = vmul.bf16 %v359, %v412
  %v476 = vmul.bf16 %v360, %v413
  %v477 = vmul.bf16 %v361, %v414
  %v478 = vld [vmem:[%s4] sm:$0xff]
  %v479 = vld [vmem:[%s4 + $0x8] sm:$0xff]
  %v480 = vld [vmem:[%s4 + $0x10] sm:$0xff]
  %v481 = vld [vmem:[%s4 + $0x18] sm:$0xff]
  %v482 = vld [vmem:[%s4 + $0x20] sm:$0xff]
  %v483 = vld [vmem:[%s4 + $0x28] sm:$0xff]
  %v484 = vld [vmem:[%s4 + $0x30] sm:$0xff]
  %v485 = vld [vmem:[%s4 + $0x38] sm:$0xff]
  %v486 = vld [vmem:[%s4 + $0x40] sm:$0xff]
  %v487 = vld [vmem:[%s4 + $0x48] sm:$0xff]
  %v488 = vld [vmem:[%s4 + $0x50] sm:$0xff]
  %v489 = vld [vmem:[%s4 + $0x58] sm:$0xff]
  %v490 = vld [vmem:[%s4 + $0x60] sm:$0xff]
  %v491 = vld [vmem:[%s4 + $0x68] sm:$0xff]
  %v492 = vld [vmem:[%s4 + $0x70] sm:$0xff]
  %v493 = vld [vmem:[%s4 + $0x78] sm:$0xff]
  %v494 = vld [vmem:[%s4 + $0x80] sm:$0xff]
  %v495 = vld [vmem:[%s4 + $0x88] sm:$0xff]
  %v496 = vld [vmem:[%s4 + $0x90] sm:$0xff]
  %v497 = vld [vmem:[%s4 + $0x98] sm:$0xff]
  %v498 = vld [vmem:[%s4 + $0xa0] sm:$0xff]
  %v499 = vld [vmem:[%s4 + $0xa8] sm:$0xff]
  %v500 = vld [vmem:[%s4 + $0xb0] sm:$0xff]
  %v501 = vld [vmem:[%s4 + $0xb8] sm:$0xff]
  %v502 = vld [vmem:[%s4 + $0xc0] sm:$0xff]
  %v503 = vld [vmem:[%s4 + $0xc8] sm:$0xff]
  %v504 = vld [vmem:[%s4 + $0xd0] sm:$0xff]
  %v505 = vld [vmem:[%s4 + $0xd8] sm:$0xff]
  %v506 = vld [vmem:[%s4 + $0xe0] sm:$0xff]
  %v507 = vld [vmem:[%s4 + $0xe8] sm:$0xff]
  %v508 = vld [vmem:[%s4 + $0xf0] sm:$0xff]
  %v509 = vld [vmem:[%s4 + $0xf8] sm:$0xff]
  %v510 = vld [vmem:[%s4 + $0x100] sm:$0xff]
  %v511 = vld [vmem:[%s4 + $0x108] sm:$0xff]
  %v512 = vld [vmem:[%s4 + $0x110] sm:$0xff]
  %v513 = vld [vmem:[%s4 + $0x118] sm:$0xff]
  %v514 = vld [vmem:[%s4 + $0x120] sm:$0xff]
  %v515 = vld [vmem:[%s4 + $0x128] sm:$0xff]
  %v516 = vld [vmem:[%s4 + $0x130] sm:$0xff]
  %v517 = vld [vmem:[%s4 + $0x138] sm:$0xff]
  %v518 = vld [vmem:[%s4 + $0x140] sm:$0xff]
  %v519 = vld [vmem:[%s4 + $0x148] sm:$0xff]
  %v520 = vld [vmem:[%s4 + $0x150] sm:$0xff]
  %v521 = vld [vmem:[%s4 + $0x158] sm:$0xff]
  %v522 = vld [vmem:[%s4 + $0x160] sm:$0xff]
  %v523 = vld [vmem:[%s4 + $0x168] sm:$0xff]
  %v524 = vld [vmem:[%s4 + $0x170] sm:$0xff]
  %v525 = vld [vmem:[%s4 + $0x178] sm:$0xff]
  %v526 = vld [vmem:[%s4 + $0x180] sm:$0xff]
  %v527 = vld [vmem:[%s4 + $0x188] sm:$0xff]
  %v528 = vld [vmem:[%s4 + $0x190] sm:$0xff]
  %v529 = vld [vmem:[%s4 + $0x198] sm:$0xff]
  %v530 = vld [vmem:[%s4 + $0x1a0] sm:$0xff]
  %v531 = vld [vmem:[%s4 + $0x1a8] sm:$0xff]
  %v532 = vld [vmem:[%s4 + $0x1b0] sm:$0xff]
  %v533 = vld [vmem:[%s4 + $0x1b8] sm:$0xff]
  %v534 = vld [vmem:[%s4 + $0x1c0] sm:$0xff]
  %v535 = vld [vmem:[%s4 + $0x1c8] sm:$0xff]
  %v536 = vld [vmem:[%s4 + $0x1d0] sm:$0xff]
  %v537 = vld [vmem:[%s4 + $0x1d8] sm:$0xff]
  %v538 = vld [vmem:[%s4 + $0x1e0] sm:$0xff]
  %v539 = vld [vmem:[%s4 + $0x1e8] sm:$0xff]
  %v540 = vld [vmem:[%s4 + $0x1f0] sm:$0xff]
  %v541 = vld [vmem:[%s4 + $0x1f8] sm:$0xff]
  %v542 = vld [vmem:[%s4 + $0x200] sm:$0xff]
  %v543 = vld [vmem:[%s4 + $0x208] sm:$0xff]
  %v544 = vld [vmem:[%s4 + $0x210] sm:$0xff]
  %v545 = vld [vmem:[%s4 + $0x218] sm:$0xff]
  %v546 = vld [vmem:[%s4 + $0x220] sm:$0xff]
  %v547 = vld [vmem:[%s4 + $0x228] sm:$0xff]
  %v548 = vld [vmem:[%s4 + $0x230] sm:$0xff]
  %v549 = vld [vmem:[%s4 + $0x238] sm:$0xff]
  %v550 = vld [vmem:[%s4 + $0x240] sm:$0xff]
  %v551 = vld [vmem:[%s4 + $0x248] sm:$0xff]
  %v552 = vld [vmem:[%s4 + $0x250] sm:$0xff]
  %v553 = vld [vmem:[%s4 + $0x258] sm:$0xff]
  %v554 = vld [vmem:[%s4 + $0x260] sm:$0xff]
  %v555 = vld [vmem:[%s4 + $0x268] sm:$0xff]
  %v556 = vld [vmem:[%s4 + $0x270] sm:$0xff]
  %v557 = vld [vmem:[%s4 + $0x278] sm:$0xff]
  %v558 = vld [vmem:[%s4 + $0x280] sm:$0xff]
  %v559 = vld [vmem:[%s4 + $0x288] sm:$0xff]
  %v560 = vld [vmem:[%s4 + $0x290] sm:$0xff]
  %v561 = vld [vmem:[%s4 + $0x298] sm:$0xff]
  %v562 = vld [vmem:[%s4 + $0x2a0] sm:$0xff]
  %v563 = vld [vmem:[%s4 + $0x2a8] sm:$0xff]
  %v564 = vld [vmem:[%s4 + $0x2b0] sm:$0xff]
  %v565 = vld [vmem:[%s4 + $0x2b8] sm:$0xff]
  %v566 = vld [vmem:[%s4 + $0x2c0] sm:$0xff]
  %v567 = vld [vmem:[%s4 + $0x2c8] sm:$0xff]
  %v568 = vld [vmem:[%s4 + $0x2d0] sm:$0xff]
  %v569 = vld [vmem:[%s4 + $0x2d8] sm:$0xff]
  %v570 = vld [vmem:[%s4 + $0x2e0] sm:$0xff]
  %v571 = vld [vmem:[%s4 + $0x2e8] sm:$0xff]
  %v572 = vld [vmem:[%s4 + $0x2f0] sm:$0xff]
  %v573 = vld [vmem:[%s4 + $0x2f8] sm:$0xff]
  %v574 = vld [vmem:[%s4 + $0x300] sm:$0xff]
  %v575 = vld [vmem:[%s4 + $0x308] sm:$0xff]
  %v576 = vld [vmem:[%s4 + $0x310] sm:$0xff]
  %v577 = vld [vmem:[%s4 + $0x318] sm:$0xff]
  %v578 = vld [vmem:[%s4 + $0x320] sm:$0xff]
  %v579 = vld [vmem:[%s4 + $0x328] sm:$0xff]
  %v580 = vld [vmem:[%s4 + $0x330] sm:$0xff]
  %v581 = vld [vmem:[%s4 + $0x338] sm:$0xff]
  %v582 = vld [vmem:[%s4 + $0x340] sm:$0xff]
  %v583 = vld [vmem:[%s4 + $0x348] sm:$0xff]
  %v584 = vld [vmem:[%s4 + $0x350] sm:$0xff]
  %v585 = vld [vmem:[%s4 + $0x358] sm:$0xff]
  %v586 = vld [vmem:[%s4 + $0x360] sm:$0xff]
  %v587 = vld [vmem:[%s4 + $0x368] sm:$0xff]
  %v588 = vld [vmem:[%s4 + $0x370] sm:$0xff]
  %v589 = vld [vmem:[%s4 + $0x378] sm:$0xff]
  %v590 = vld [vmem:[%s4 + $0x380] sm:$0xff]
  %v591 = vld [vmem:[%s4 + $0x388] sm:$0xff]
  %v592 = vld [vmem:[%s4 + $0x390] sm:$0xff]
  %v593 = vld [vmem:[%s4 + $0x398] sm:$0xff]
  %v594 = vld [vmem:[%s4 + $0x3a0] sm:$0xff]
  %v595 = vld [vmem:[%s4 + $0x3a8] sm:$0xff]
  %v596 = vld [vmem:[%s4 + $0x3b0] sm:$0xff]
  %v597 = vld [vmem:[%s4 + $0x3b8] sm:$0xff]
  %v598 = vld [vmem:[%s4 + $0x3c0] sm:$0xff]
  %v599 = vld [vmem:[%s4 + $0x3c8] sm:$0xff]
  %v600 = vld [vmem:[%s4 + $0x3d0] sm:$0xff]
  %v601 = vld [vmem:[%s4 + $0x3d8] sm:$0xff]
  %v602 = vld [vmem:[%s4 + $0x3e0] sm:$0xff]
  %v603 = vld [vmem:[%s4 + $0x3e8] sm:$0xff]
  %v604 = vld [vmem:[%s4 + $0x3f0] sm:$0xff]
  %v605 = vld [vmem:[%s4 + $0x3f8] sm:$0xff]
  %v606 = vld [vmem:[%s4 + $0x400] sm:$0xff]
  %v607 = vld [vmem:[%s4 + $0x408] sm:$0xff]
  %v608 = vld [vmem:[%s4 + $0x410] sm:$0xff]
  %v609 = vld [vmem:[%s4 + $0x418] sm:$0xff]
  %v610 = vld [vmem:[%s4 + $0x420] sm:$0xff]
  %v611 = vld [vmem:[%s4 + $0x428] sm:$0xff]
  %v612 = vld [vmem:[%s4 + $0x430] sm:$0xff]
  %v613 = vld [vmem:[%s4 + $0x438] sm:$0xff]
  %v614 = vld [vmem:[%s4 + $0x440] sm:$0xff]
  %v615 = vld [vmem:[%s4 + $0x448] sm:$0xff]
  %v616 = vld [vmem:[%s4 + $0x450] sm:$0xff]
  %v617 = vld [vmem:[%s4 + $0x458] sm:$0xff]
  %v618 = vld [vmem:[%s4 + $0x460] sm:$0xff]
  %v619 = vld [vmem:[%s4 + $0x468] sm:$0xff]
  %v620 = vld [vmem:[%s4 + $0x470] sm:$0xff]
  %v621 = vld [vmem:[%s4 + $0x478] sm:$0xff]
  %v622 = vld [vmem:[%s4 + $0x480] sm:$0xff]
  %v623 = vld [vmem:[%s4 + $0x488] sm:$0xff]
  %v624 = vld [vmem:[%s4 + $0x490] sm:$0xff]
  %v625 = vld [vmem:[%s4 + $0x498] sm:$0xff]
  %v626 = vld [vmem:[%s4 + $0x4a0] sm:$0xff]
  %v627 = vld [vmem:[%s4 + $0x4a8] sm:$0xff]
  %v628 = vld [vmem:[%s4 + $0x4b0] sm:$0xff]
  %v629 = vld [vmem:[%s4 + $0x4b8] sm:$0xff]
  %v630 = vld [vmem:[%s4 + $0x4c0] sm:$0xff]
  %v631 = vld [vmem:[%s4 + $0x4c8] sm:$0xff]
  %v632 = vld [vmem:[%s4 + $0x4d0] sm:$0xff]
  %v633 = vld [vmem:[%s4 + $0x4d8] sm:$0xff]
  %v634 = vld [vmem:[%s4 + $0x4e0] sm:$0xff]
  %v635 = vld [vmem:[%s4 + $0x4e8] sm:$0xff]
  %v636 = vld [vmem:[%s4 + $0x4f0] sm:$0xff]
  %v637 = vld [vmem:[%s4 + $0x4f8] sm:$0xff]
  %v638 = vpack.c.bf16 %v480, %v478
  %v639 = vpack.c.bf16 %v481, %v479
  %v640 = vpack.c.bf16 %v484, %v482
  %v641 = vpack.c.bf16 %v485, %v483
  %v642 = vpack.c.bf16 %v488, %v486
  %v643 = vpack.c.bf16 %v489, %v487
  %v644 = vpack.c.bf16 %v492, %v490
  %v645 = vpack.c.bf16 %v493, %v491
  %v646 = vpack.c.bf16 %v496, %v494
  %v647 = vpack.c.bf16 %v497, %v495
  %v648 = vpack.c.bf16 %v500, %v498
  %v649 = vpack.c.bf16 %v501, %v499
  %v650 = vpack.c.bf16 %v504, %v502
  %v651 = vpack.c.bf16 %v505, %v503
  %v652 = vpack.c.bf16 %v508, %v506
  %v653 = vpack.c.bf16 %v509, %v507
  %v654 = vpack.c.bf16 %v512, %v510
  %v655 = vpack.c.bf16 %v513, %v511
  %v656 = vpack.c.bf16 %v516, %v514
  %v657 = vpack.c.bf16 %v517, %v515
  %v658 = vpack.c.bf16 %v520, %v518
  %v659 = vpack.c.bf16 %v521, %v519
  %v660 = vpack.c.bf16 %v524, %v522
  %v661 = vpack.c.bf16 %v525, %v523
  %v662 = vpack.c.bf16 %v528, %v526
  %v663 = vpack.c.bf16 %v529, %v527
  %v664 = vpack.c.bf16 %v532, %v530
  %v665 = vpack.c.bf16 %v533, %v531
  %v666 = vpack.c.bf16 %v536, %v534
  %v667 = vpack.c.bf16 %v537, %v535
  %v668 = vpack.c.bf16 %v540, %v538
  %v669 = vpack.c.bf16 %v541, %v539
  %v670 = vpack.c.bf16 %v544, %v542
  %v671 = vpack.c.bf16 %v545, %v543
  %v672 = vpack.c.bf16 %v548, %v546
  %v673 = vpack.c.bf16 %v549, %v547
  %v674 = vpack.c.bf16 %v552, %v550
  %v675 = vpack.c.bf16 %v553, %v551
  %v676 = vpack.c.bf16 %v556, %v554
  %v677 = vpack.c.bf16 %v557, %v555
  %v678 = vpack.c.bf16 %v560, %v558
  %v679 = vpack.c.bf16 %v561, %v559
  %v680 = vpack.c.bf16 %v564, %v562
  %v681 = vpack.c.bf16 %v565, %v563
  %v682 = vpack.c.bf16 %v568, %v566
  %v683 = vpack.c.bf16 %v569, %v567
  %v684 = vpack.c.bf16 %v572, %v570
  %v685 = vpack.c.bf16 %v573, %v571
  %v686 = vpack.c.bf16 %v576, %v574
  %v687 = vpack.c.bf16 %v577, %v575
  %v688 = vpack.c.bf16 %v580, %v578
  %v689 = vpack.c.bf16 %v581, %v579
  %v690 = vpack.c.bf16 %v584, %v582
  %v691 = vpack.c.bf16 %v585, %v583
  %v692 = vpack.c.bf16 %v588, %v586
  %v693 = vpack.c.bf16 %v589, %v587
  %v694 = vpack.c.bf16 %v592, %v590
  %v695 = vpack.c.bf16 %v593, %v591
  %v696 = vpack.c.bf16 %v596, %v594
  %v697 = vpack.c.bf16 %v597, %v595
  %v698 = vpack.c.bf16 %v600, %v598
  %v699 = vpack.c.bf16 %v601, %v599
  %v700 = vpack.c.bf16 %v604, %v602
  %v701 = vpack.c.bf16 %v605, %v603
  %v702 = vpack.c.bf16 %v608, %v606
  %v703 = vpack.c.bf16 %v609, %v607
  %v704 = vpack.c.bf16 %v612, %v610
  %v705 = vpack.c.bf16 %v613, %v611
  %v706 = vpack.c.bf16 %v616, %v614
  %v707 = vpack.c.bf16 %v617, %v615
  %v708 = vpack.c.bf16 %v620, %v618
  %v709 = vpack.c.bf16 %v621, %v619
  %v710 = vpack.c.bf16 %v624, %v622
  %v711 = vpack.c.bf16 %v625, %v623
  %v712 = vpack.c.bf16 %v628, %v626
  %v713 = vpack.c.bf16 %v629, %v627
  %v714 = vpack.c.bf16 %v632, %v630
  %v715 = vpack.c.bf16 %v633, %v631
  %v716 = vpack.c.bf16 %v636, %v634
  %v717 = vpack.c.bf16 %v637, %v635
  %v778 = vunpack.c.l.b16 %v418
  %v779 = vunpack.c.h.b16 %v418
  %v780 = vunpack.c.l.b16 %v419
  %v781 = vunpack.c.h.b16 %v419
  %v782 = vunpack.c.l.b16 %v420
  %v783 = vunpack.c.l.b16 %v421
  %v784 = vunpack.c.h.b16 %v421
  %v785 = vunpack.c.l.b16 %v422
  %v786 = vunpack.c.h.b16 %v422
  %v787 = vunpack.c.l.b16 %v423
  %v788 = vunpack.c.l.b16 %v424
  %v789 = vunpack.c.h.b16 %v424
  %v790 = vunpack.c.l.b16 %v425
  %v791 = vunpack.c.h.b16 %v425
  %v792 = vunpack.c.l.b16 %v426
  %v793 = vunpack.c.l.b16 %v427
  %v794 = vunpack.c.h.b16 %v427
  %v795 = vunpack.c.l.b16 %v428
  %v796 = vunpack.c.h.b16 %v428
  %v797 = vunpack.c.l.b16 %v429
  %v798 = vunpack.c.l.b16 %v430
  %v799 = vunpack.c.h.b16 %v430
  %v800 = vunpack.c.l.b16 %v431
  %v801 = vunpack.c.h.b16 %v431
  %v802 = vunpack.c.l.b16 %v432
  %v803 = vunpack.c.l.b16 %v433
  %v804 = vunpack.c.h.b16 %v433
  %v805 = vunpack.c.l.b16 %v434
  %v806 = vunpack.c.h.b16 %v434
  %v807 = vunpack.c.l.b16 %v435
  %v808 = vunpack.c.l.b16 %v436
  %v809 = vunpack.c.h.b16 %v436
  %v810 = vunpack.c.l.b16 %v437
  %v811 = vunpack.c.h.b16 %v437
  %v812 = vunpack.c.l.b16 %v438
  %v813 = vunpack.c.l.b16 %v439
  %v814 = vunpack.c.h.b16 %v439
  %v815 = vunpack.c.l.b16 %v440
  %v816 = vunpack.c.h.b16 %v440
  %v817 = vunpack.c.l.b16 %v441
  %v818 = vunpack.c.l.b16 %v442
  %v819 = vunpack.c.h.b16 %v442
  %v820 = vunpack.c.l.b16 %v443
  %v821 = vunpack.c.h.b16 %v443
  %v822 = vunpack.c.l.b16 %v444
  %v823 = vunpack.c.l.b16 %v445
  %v824 = vunpack.c.h.b16 %v445
  %v825 = vunpack.c.l.b16 %v446
  %v826 = vunpack.c.h.b16 %v446
  %v827 = vunpack.c.l.b16 %v447
  %v828 = vunpack.c.l.b16 %v448
  %v829 = vunpack.c.h.b16 %v448
  %v830 = vunpack.c.l.b16 %v449
  %v831 = vunpack.c.h.b16 %v449
  %v832 = vunpack.c.l.b16 %v450
  %v833 = vunpack.c.l.b16 %v451
  %v834 = vunpack.c.h.b16 %v451
  %v835 = vunpack.c.l.b16 %v452
  %v836 = vunpack.c.h.b16 %v452
  %v837 = vunpack.c.l.b16 %v453
  %v838 = vunpack.c.l.b16 %v454
  %v839 = vunpack.c.h.b16 %v454
  %v840 = vunpack.c.l.b16 %v455
  %v841 = vunpack.c.h.b16 %v455
  %v842 = vunpack.c.l.b16 %v456
  %v843 = vunpack.c.l.b16 %v457
  %v844 = vunpack.c.h.b16 %v457
  %v845 = vunpack.c.l.b16 %v458
  %v846 = vunpack.c.h.b16 %v458
  %v847 = vunpack.c.l.b16 %v459
  %v848 = vunpack.c.l.b16 %v460
  %v849 = vunpack.c.h.b16 %v460
  %v850 = vunpack.c.l.b16 %v461
  %v851 = vunpack.c.h.b16 %v461
  %v852 = vunpack.c.l.b16 %v462
  %v853 = vunpack.c.l.b16 %v463
  %v854 = vunpack.c.h.b16 %v463
  %v855 = vunpack.c.l.b16 %v464
  %v856 = vunpack.c.h.b16 %v464
  %v857 = vunpack.c.l.b16 %v465
  %v858 = vunpack.c.l.b16 %v466
  %v859 = vunpack.c.h.b16 %v466
  %v860 = vunpack.c.l.b16 %v467
  %v861 = vunpack.c.h.b16 %v467
  %v862 = vunpack.c.l.b16 %v468
  %v863 = vunpack.c.l.b16 %v469
  %v864 = vunpack.c.h.b16 %v469
  %v865 = vunpack.c.l.b16 %v470
  %v866 = vunpack.c.h.b16 %v470
  %v867 = vunpack.c.l.b16 %v471
  %v868 = vunpack.c.l.b16 %v472
  %v869 = vunpack.c.h.b16 %v472
  %v870 = vunpack.c.l.b16 %v473
  %v871 = vunpack.c.h.b16 %v473
  %v872 = vunpack.c.l.b16 %v474
  %v873 = vunpack.c.l.b16 %v475
  %v874 = vunpack.c.h.b16 %v475
  %v875 = vunpack.c.l.b16 %v476
  %v876 = vunpack.c.h.b16 %v476
  %v877 = vunpack.c.l.b16 %v477
  %v878 = vpack.c.b16 %v783, %v778
  %v879 = vpack.c.b16 %v784, %v779
  %v880 = vpack.c.b16 %v785, %v780
  %v881 = vpack.c.b16 %v786, %v781
  %v882 = vpack.c.b16 %v787, %v782
  %v883 = vpack.c.b16 %v793, %v788
  %v884 = vpack.c.b16 %v794, %v789
  %v885 = vpack.c.b16 %v795, %v790
  %v886 = vpack.c.b16 %v796, %v791
  %v887 = vpack.c.b16 %v797, %v792
  %v888 = vpack.c.b16 %v803, %v798
  %v889 = vpack.c.b16 %v804, %v799
  %v890 = vpack.c.b16 %v805, %v800
  %v891 = vpack.c.b16 %v806, %v801
  %v892 = vpack.c.b16 %v807, %v802
  %v893 = vpack.c.b16 %v813, %v808
  %v894 = vpack.c.b16 %v814, %v809
  %v895 = vpack.c.b16 %v815, %v810
  %v896 = vpack.c.b16 %v816, %v811
  %v897 = vpack.c.b16 %v817, %v812
  %v898 = vpack.c.b16 %v823, %v818
  %v899 = vpack.c.b16 %v824, %v819
  %v900 = vpack.c.b16 %v825, %v820
  %v901 = vpack.c.b16 %v826, %v821
  %v902 = vpack.c.b16 %v827, %v822
  %v903 = vpack.c.b16 %v833, %v828
  %v904 = vpack.c.b16 %v834, %v829
  %v905 = vpack.c.b16 %v835, %v830
  %v906 = vpack.c.b16 %v836, %v831
  %v907 = vpack.c.b16 %v837, %v832
  %v908 = vpack.c.b16 %v843, %v838
  %v909 = vpack.c.b16 %v844, %v839
  %v910 = vpack.c.b16 %v845, %v840
  %v911 = vpack.c.b16 %v846, %v841
  %v912 = vpack.c.b16 %v847, %v842
  %v913 = vpack.c.b16 %v853, %v848
  %v914 = vpack.c.b16 %v854, %v849
  %v915 = vpack.c.b16 %v855, %v850
  %v916 = vpack.c.b16 %v856, %v851
  %v917 = vpack.c.b16 %v857, %v852
  %v918 = vpack.c.b16 %v863, %v858
  %v919 = vpack.c.b16 %v864, %v859
  %v920 = vpack.c.b16 %v865, %v860
  %v921 = vpack.c.b16 %v866, %v861
  %v922 = vpack.c.b16 %v867, %v862
  %v923 = vpack.c.b16 %v873, %v868
  %v924 = vpack.c.b16 %v874, %v869
  %v925 = vpack.c.b16 %v875, %v870
  %v926 = vpack.c.b16 %v876, %v871
  %v927 = vpack.c.b16 %v877, %v872
  %978 = vmatprep.subr.bf16.mxu0 %v639
  %979 = vmatpush1.bf16.msra.mxu0 %v638
  %980 = vmatprep.subr.bf16.mxu0 %v641
  %981 = vmatpush1.bf16.msra.mxu0 %v640
  %982 = vmatprep.subr.bf16.mxu0 %v643
  %983 = vmatpush1.bf16.msra.mxu0 %v642
  %984 = vmatprep.subr.bf16.mxu0 %v645
  %985 = vmatpush1.bf16.msra.mxu0 %v644
  %986 = vmatprep.subr.bf16.mxu0 %v647
  %987 = vmatpush1.bf16.msra.mxu0 %v646
  %988 = vmatprep.subr.bf16.mxu0 %v649
  %989 = vmatpush1.bf16.msra.mxu0 %v648
  %990 = vmatprep.subr.bf16.mxu0 %v651
  %991 = vmatpush1.bf16.msra.mxu0 %v650
  %992 = vmatprep.subr.bf16.mxu0 %v653
  %993 = vmatpush1.bf16.msra.mxu0 %v652
  %994 = vmatprep.subr.bf16.mxu0 %v655
  %995 = vmatpush1.bf16.msra.mxu0 %v654
  %996 = vmatprep.subr.bf16.mxu0 %v657
  %997 = vmatpush1.bf16.msra.mxu0 %v656
  %998 = vmatprep.subr.bf16.mxu0 %v659
  %999 = vmatpush1.bf16.msra.mxu0 %v658
  %1000 = vmatprep.subr.bf16.mxu0 %v661
  %1001 = vmatpush1.bf16.msra.mxu0 %v660
  %1002 = vmatprep.subr.bf16.mxu0 %v663
  %1003 = vmatpush1.bf16.msra.mxu0 %v662
  %1004 = vmatprep.subr.bf16.mxu0 %v665
  %1005 = vmatpush1.bf16.msra.mxu0 %v664
  %1006 = vmatprep.subr.bf16.mxu0 %v667
  %1007 = vmatpush1.bf16.msra.mxu0 %v666
  %1008 = vmatprep.subr.bf16.mxu0 %v669
  %1009 = vmatpush1.bf16.msra.mxu0 %v668
  %1010 = vmatprep.mubr.bf16.mxu0 %v879
  %1011 = vmatmul.mubr.bf16.gmra.mrb[0].mxu0 %v878
  %v1012 = vpop.f32.mrb[0].mxu0
  %v1013 = vadd.f32 0.0, %v1012
  %v1014 = vpop.f32.mrb[0].mxu0
  %v1015 = vadd.f32 0.0, %v1014
  %v1016 = vpop.f32.mrb[0].mxu0
  %v1017 = vadd.f32 0.0, %v1016
  %v1018 = vpop.f32.mrb[0].mxu0
  %v1019 = vadd.f32 0.0, %v1018
  %1020 = vmatprep.mubr.bf16.mxu0 %v884
  %1021 = vmatmul.mubr.bf16.gmra.mrb[0].mxu0 %v883
  %v1022 = vpop.f32.mrb[0].mxu0
  %v1023 = vadd.f32 0.0, %v1022
  %v1024 = vpop.f32.mrb[0].mxu0
  %v1025 = vadd.f32 0.0, %v1024
  %v1026 = vpop.f32.mrb[0].mxu0
  %v1027 = vadd.f32 0.0, %v1026
  %v1028 = vpop.f32.mrb[0].mxu0
  %v1029 = vadd.f32 0.0, %v1028
  %1030 = vmatprep.mubr.bf16.mxu0 %v889
  %1031 = vmatmul.mubr.bf16.gmra.mrb[0].mxu0 %v888
  %v1032 = vpop.f32.mrb[0].mxu0
  %v1033 = vadd.f32 0.0, %v1032
  %v1034 = vpop.f32.mrb[0].mxu0
  %v1035 = vadd.f32 0.0, %v1034
  %v1036 = vpop.f32.mrb[0].mxu0
  %v1037 = vadd.f32 0.0, %v1036
  %v1038 = vpop.f32.mrb[0].mxu0
  %v1039 = vadd.f32 0.0, %v1038
  %1040 = vmatprep.mubr.bf16.mxu0 %v894
  %1041 = vmatmul.mubr.bf16.gmra.mrb[0].mxu0 %v893
  %v1042 = vpop.f32.mrb[0].mxu0
  %v1043 = vadd.f32 0.0, %v1042
  %v1044 = vpop.f32.mrb[0].mxu0
  %v1045 = vadd.f32 0.0, %v1044
  %v1046 = vpop.f32.mrb[0].mxu0
  %v1047 = vadd.f32 0.0, %v1046
  %v1048 = vpop.f32.mrb[0].mxu0
  %v1049 = vadd.f32 0.0, %v1048
  %1050 = vmatprep.mubr.bf16.mxu0 %v899
  %1051 = vmatmul.mubr.bf16.gmra.mrb[0].mxu0 %v898
  %v1052 = vpop.f32.mrb[0].mxu0
  %v1053 = vadd.f32 0.0, %v1052
  %v1054 = vpop.f32.mrb[0].mxu0
  %v1055 = vadd.f32 0.0, %v1054
  %v1056 = vpop.f32.mrb[0].mxu0
  %v1057 = vadd.f32 0.0, %v1056
  %v1058 = vpop.f32.mrb[0].mxu0
  %v1059 = vadd.f32 0.0, %v1058
  %1060 = vmatprep.mubr.bf16.mxu0 %v904
  %1061 = vmatmul.mubr.bf16.gmra.mrb[0].mxu0 %v903
  %v1062 = vpop.f32.mrb[0].mxu0
  %v1063 = vadd.f32 0.0, %v1062
  %v1064 = vpop.f32.mrb[0].mxu0
  %v1065 = vadd.f32 0.0, %v1064
  %v1066 = vpop.f32.mrb[0].mxu0
  %v1067 = vadd.f32 0.0, %v1066
  %v1068 = vpop.f32.mrb[0].mxu0
  %v1069 = vadd.f32 0.0, %v1068
  %1070 = vmatprep.mubr.bf16.mxu0 %v909
  %1071 = vmatmul.mubr.bf16.gmra.mrb[0].mxu0 %v908
  %v1072 = vpop.f32.mrb[0].mxu0
  %v1073 = vadd.f32 0.0, %v1072
  %v1074 = vpop.f32.mrb[0].mxu0
  %v1075 = vadd.f32 0.0, %v1074
  %v1076 = vpop.f32.mrb[0].mxu0
  %v1077 = vadd.f32 0.0, %v1076
  %v1078 = vpop.f32.mrb[0].mxu0
  %v1079 = vadd.f32 0.0, %v1078
  %1080 = vmatprep.mubr.bf16.mxu0 %v914
  %1081 = vmatmul.mubr.bf16.gmra.mrb[0].mxu0 %v913
  %v1082 = vpop.f32.mrb[0].mxu0
  %v1083 = vadd.f32 0.0, %v1082
  %v1084 = vpop.f32.mrb[0].mxu0
  %v1085 = vadd.f32 0.0, %v1084
  %v1086 = vpop.f32.mrb[0].mxu0
  %v1087 = vadd.f32 0.0, %v1086
  %v1088 = vpop.f32.mrb[0].mxu0
  %v1089 = vadd.f32 0.0, %v1088
  %1090 = vmatprep.mubr.bf16.mxu0 %v919
  %1091 = vmatmul.mubr.bf16.gmra.mrb[0].mxu0 %v918
  %v1092 = vpop.f32.mrb[0].mxu0
  %v1093 = vadd.f32 0.0, %v1092
  %v1094 = vpop.f32.mrb[0].mxu0
  %v1095 = vadd.f32 0.0, %v1094
  %v1096 = vpop.f32.mrb[0].mxu0
  %v1097 = vadd.f32 0.0, %v1096
  %v1098 = vpop.f32.mrb[0].mxu0
  %v1099 = vadd.f32 0.0, %v1098
  %1100 = vmatprep.mubr.bf16.mxu0 %v924
  %1101 = vmatmul.mubr.bf16.gmra.mrb[0].mxu0 %v923
  %v1102 = vpop.f32.mrb[0].mxu0
  %v1103 = vadd.f32 0.0, %v1102
  %v1104 = vpop.f32.mrb[0].mxu0
  %v1105 = vadd.f32 0.0, %v1104
  %v1106 = vpop.f32.mrb[0].mxu0
  %v1107 = vadd.f32 0.0, %v1106
  %v1108 = vpop.f32.mrb[0].mxu0
  %v1109 = vadd.f32 0.0, %v1108
  %1110 = vdwg.mxu0
  %1111 = vmatprep.subr.bf16.mxu0 %v671
  %1112 = vmatpush1.bf16.msra.mxu0 %v670
  %1113 = vmatprep.subr.bf16.mxu0 %v673
  %1114 = vmatpush1.bf16.msra.mxu0 %v672
  %1115 = vmatprep.subr.bf16.mxu0 %v675
  %1116 = vmatpush1.bf16.msra.mxu0 %v674
  %1117 = vmatprep.subr.bf16.mxu0 %v677
  %1118 = vmatpush1.bf16.msra.mxu0 %v676
  %1119 = vmatprep.subr.bf16.mxu0 %v679
  %1120 = vmatpush1.bf16.msra.mxu0 %v678
  %1121 = vmatprep.subr.bf16.mxu0 %v681
  %1122 = vmatpush1.bf16.msra.mxu0 %v680
  %1123 = vmatprep.subr.bf16.mxu0 %v683
  %1124 = vmatpush1.bf16.msra.mxu0 %v682
  %1125 = vmatprep.subr.bf16.mxu0 %v685
  %1126 = vmatpush1.bf16.msra.mxu0 %v684
  %1127 = vmatprep.subr.bf16.mxu0 %v687
  %1128 = vmatpush1.bf16.msra.mxu0 %v686
  %1129 = vmatprep.subr.bf16.mxu0 %v689
  %1130 = vmatpush1.bf16.msra.mxu0 %v688
  %1131 = vmatprep.subr.bf16.mxu0 %v691
  %1132 = vmatpush1.bf16.msra.mxu0 %v690
  %1133 = vmatprep.subr.bf16.mxu0 %v693
  %1134 = vmatpush1.bf16.msra.mxu0 %v692
  %1135 = vmatprep.subr.bf16.mxu0 %v695
  %1136 = vmatpush1.bf16.msra.mxu0 %v694
  %1137 = vmatprep.subr.bf16.mxu0 %v697
  %1138 = vmatpush1.bf16.msra.mxu0 %v696
  %1139 = vmatprep.subr.bf16.mxu0 %v699
  %1140 = vmatpush1.bf16.msra.mxu0 %v698
  %1141 = vmatprep.subr.bf16.mxu0 %v701
  %1142 = vmatpush1.bf16.msra.mxu0 %v700
  %1143 = vmatprep.mubr.bf16.mxu0 %v881
  %1144 = vmatmul.mubr.bf16.gmra.mrb[0].mxu0 %v880
  %v1145 = vpop.f32.mrb[0].mxu0
  %v1146 = vadd.f32 %v1013, %v1145
  %v1147 = vpop.f32.mrb[0].mxu0
  %v1148 = vadd.f32 %v1015, %v1147
  %v1149 = vpop.f32.mrb[0].mxu0
  %v1150 = vadd.f32 %v1017, %v1149
  %v1151 = vpop.f32.mrb[0].mxu0
  %v1152 = vadd.f32 %v1019, %v1151
  %1153 = vmatprep.mubr.bf16.mxu0 %v886
  %1154 = vmatmul.mubr.bf16.gmra.mrb[0].mxu0 %v885
  %v1155 = vpop.f32.mrb[0].mxu0
  %v1156 = vadd.f32 %v1023, %v1155
  %v1157 = vpop.f32.mrb[0].mxu0
  %v1158 = vadd.f32 %v1025, %v1157
  %v1159 = vpop.f32.mrb[0].mxu0
  %v1160 = vadd.f32 %v1027, %v1159
  %v1161 = vpop.f32.mrb[0].mxu0
  %v1162 = vadd.f32 %v1029, %v1161
  %1163 = vmatprep.mubr.bf16.mxu0 %v891
  %1164 = vmatmul.mubr.bf16.gmra.mrb[0].mxu0 %v890
  %v1165 = vpop.f32.mrb[0].mxu0
  %v1166 = vadd.f32 %v1033, %v1165
  %v1167 = vpop.f32.mrb[0].mxu0
  %v1168 = vadd.f32 %v1035, %v1167
  %v1169 = vpop.f32.mrb[0].mxu0
  %v1170 = vadd.f32 %v1037, %v1169
  %v1171 = vpop.f32.mrb[0].mxu0
  %v1172 = vadd.f32 %v1039, %v1171
  %1173 = vmatprep.mubr.bf16.mxu0 %v896
  %1174 = vmatmul.mubr.bf16.gmra.mrb[0].mxu0 %v895
  %v1175 = vpop.f32.mrb[0].mxu0
  %v1176 = vadd.f32 %v1043, %v1175
  %v1177 = vpop.f32.mrb[0].mxu0
  %v1178 = vadd.f32 %v1045, %v1177
  %v1179 = vpop.f32.mrb[0].mxu0
  %v1180 = vadd.f32 %v1047, %v1179
  %v1181 = vpop.f32.mrb[0].mxu0
  %v1182 = vadd.f32 %v1049, %v1181
  %1183 = vmatprep.mubr.bf16.mxu0 %v901
  %1184 = vmatmul.mubr.bf16.gmra.mrb[0].mxu0 %v900
  %v1185 = vpop.f32.mrb[0].mxu0
  %v1186 = vadd.f32 %v1053, %v1185
  %v1187 = vpop.f32.mrb[0].mxu0
  %v1188 = vadd.f32 %v1055, %v1187
  %v1189 = vpop.f32.mrb[0].mxu0
  %v1190 = vadd.f32 %v1057, %v1189
  %v1191 = vpop.f32.mrb[0].mxu0
  %v1192 = vadd.f32 %v1059, %v1191
  %1193 = vmatprep.mubr.bf16.mxu0 %v906
  %1194 = vmatmul.mubr.bf16.gmra.mrb[0].mxu0 %v905
  %v1195 = vpop.f32.mrb[0].mxu0
  %v1196 = vadd.f32 %v1063, %v1195
  %v1197 = vpop.f32.mrb[0].mxu0
  %v1198 = vadd.f32 %v1065, %v1197
  %v1199 = vpop.f32.mrb[0].mxu0
  %v1200 = vadd.f32 %v1067, %v1199
  %v1201 = vpop.f32.mrb[0].mxu0
  %v1202 = vadd.f32 %v1069, %v1201
  %1203 = vmatprep.mubr.bf16.mxu0 %v911
  %1204 = vmatmul.mubr.bf16.gmra.mrb[0].mxu0 %v910
  %v1205 = vpop.f32.mrb[0].mxu0
  %v1206 = vadd.f32 %v1073, %v1205
  %v1207 = vpop.f32.mrb[0].mxu0
  %v1208 = vadd.f32 %v1075, %v1207
  %v1209 = vpop.f32.mrb[0].mxu0
  %v1210 = vadd.f32 %v1077, %v1209
  %v1211 = vpop.f32.mrb[0].mxu0
  %v1212 = vadd.f32 %v1079, %v1211
  %1213 = vmatprep.mubr.bf16.mxu0 %v916
  %1214 = vmatmul.mubr.bf16.gmra.mrb[0].mxu0 %v915
  %v1215 = vpop.f32.mrb[0].mxu0
  %v1216 = vadd.f32 %v1083, %v1215
  %v1217 = vpop.f32.mrb[0].mxu0
  %v1218 = vadd.f32 %v1085, %v1217
  %v1219 = vpop.f32.mrb[0].mxu0
  %v1220 = vadd.f32 %v1087, %v1219
  %v1221 = vpop.f32.mrb[0].mxu0
  %v1222 = vadd.f32 %v1089, %v1221
  %1223 = vmatprep.mubr.bf16.mxu0 %v921
  %1224 = vmatmul.mubr.bf16.gmra.mrb[0].mxu0 %v920
  %v1225 = vpop.f32.mrb[0].mxu0
  %v1226 = vadd.f32 %v1093, %v1225
  %v1227 = vpop.f32.mrb[0].mxu0
  %v1228 = vadd.f32 %v1095, %v1227
  %v1229 = vpop.f32.mrb[0].mxu0
  %v1230 = vadd.f32 %v1097, %v1229
  %v1231 = vpop.f32.mrb[0].mxu0
  %v1232 = vadd.f32 %v1099, %v1231
  %1233 = vmatprep.mubr.bf16.mxu0 %v926
  %1234 = vmatmul.mubr.bf16.gmra.mrb[0].mxu0 %v925
  %v1235 = vpop.f32.mrb[0].mxu0
  %v1236 = vadd.f32 %v1103, %v1235
  %v1237 = vpop.f32.mrb[0].mxu0
  %v1238 = vadd.f32 %v1105, %v1237
  %v1239 = vpop.f32.mrb[0].mxu0
  %v1240 = vadd.f32 %v1107, %v1239
  %v1241 = vpop.f32.mrb[0].mxu0
  %v1242 = vadd.f32 %v1109, %v1241
  %1243 = vdwg.mxu0
  %1244 = vmatprep.subr.bf16.mxu0 %v703
  %1245 = vmatpush1.bf16.msra.mxu0 %v702
  %1246 = vmatprep.subr.bf16.mxu0 %v705
  %1247 = vmatpush1.bf16.msra.mxu0 %v704
  %1248 = vmatprep.subr.bf16.mxu0 %v707
  %1249 = vmatpush1.bf16.msra.mxu0 %v706
  %1250 = vmatprep.subr.bf16.mxu0 %v709
  %1251 = vmatpush1.bf16.msra.mxu0 %v708
  %1252 = vmatprep.subr.bf16.mxu0 %v711
  %1253 = vmatpush1.bf16.msra.mxu0 %v710
  %1254 = vmatprep.subr.bf16.mxu0 %v713
  %1255 = vmatpush1.bf16.msra.mxu0 %v712
  %1256 = vmatprep.subr.bf16.mxu0 %v715
  %1257 = vmatpush1.bf16.msra.mxu0 %v714
  %1258 = vmatprep.subr.bf16.mxu0 %v717
  %1259 = vmatpush1.bf16.msra.mxu0 %v716
  %1260 = vmatprep.subr.bf16.mxu0 0
  %1261 = vmatpush1.bf16.msra.mxu0 0
  %1262 = vmatprep.subr.bf16.mxu0 0
  %1263 = vmatpush1.bf16.msra.mxu0 0
  %1264 = vmatprep.subr.bf16.mxu0 0
  %1265 = vmatpush1.bf16.msra.mxu0 0
  %1266 = vmatprep.subr.bf16.mxu0 0
  %1267 = vmatpush1.bf16.msra.mxu0 0
  %1268 = vmatprep.subr.bf16.mxu0 0
  %1269 = vmatpush1.bf16.msra.mxu0 0
  %1270 = vmatprep.subr.bf16.mxu0 0
  %1271 = vmatpush1.bf16.msra.mxu0 0
  %1272 = vmatprep.subr.bf16.mxu0 0
  %1273 = vmatpush1.bf16.msra.mxu0 0
  %1274 = vmatprep.subr.bf16.mxu0 0
  %1275 = vmatpush1.bf16.msra.mxu0 0
  %1276 = vmatprep.mubr.bf16.mxu0 0
  %1277 = vmatmul.mubr.bf16.gmra.mrb[0].mxu0 %v882
  %v1278 = vpop.f32.mrb[0].mxu0
  %v1279 = vadd.f32 %v1146, %v1278
  %v1280 = vpop.f32.mrb[0].mxu0
  %v1281 = vadd.f32 %v1148, %v1280
  %v1282 = vpop.f32.mrb[0].mxu0
  %v1283 = vadd.f32 %v1150, %v1282
  %v1284 = vpop.f32.mrb[0].mxu0
  %v1285 = vadd.f32 %v1152, %v1284
  %1286 = vmatprep.mubr.bf16.mxu0 0
  %1287 = vmatmul.mubr.bf16.gmra.mrb[0].mxu0 %v887
  %v1288 = vpop.f32.mrb[0].mxu0
  %v1289 = vadd.f32 %v1156, %v1288
  %v1290 = vpop.f32.mrb[0].mxu0
  %v1291 = vadd.f32 %v1158, %v1290
  %v1292 = vpop.f32.mrb[0].mxu0
  %v1293 = vadd.f32 %v1160, %v1292
  %v1294 = vpop.f32.mrb[0].mxu0
  %v1295 = vadd.f32 %v1162, %v1294
  %1296 = vmatprep.mubr.bf16.mxu0 0
  %1297 = vmatmul.mubr.bf16.gmra.mrb[0].mxu0 %v892
  %v1298 = vpop.f32.mrb[0].mxu0
  %v1299 = vadd.f32 %v1166, %v1298
  %v1300 = vpop.f32.mrb[0].mxu0
  %v1301 = vadd.f32 %v1168, %v1300
  %v1302 = vpop.f32.mrb[0].mxu0
  %v1303 = vadd.f32 %v1170, %v1302
  %v1304 = vpop.f32.mrb[0].mxu0
  %v1305 = vadd.f32 %v1172, %v1304
  %1306 = vmatprep.mubr.bf16.mxu0 0
  %1307 = vmatmul.mubr.bf16.gmra.mrb[0].mxu0 %v897
  %v1308 = vpop.f32.mrb[0].mxu0
  %v1309 = vadd.f32 %v1176, %v1308
  %v1310 = vpop.f32.mrb[0].mxu0
  %v1311 = vadd.f32 %v1178, %v1310
  %v1312 = vpop.f32.mrb[0].mxu0
  %v1313 = vadd.f32 %v1180, %v1312
  %v1314 = vpop.f32.mrb[0].mxu0
  %v1315 = vadd.f32 %v1182, %v1314
  %1316 = vmatprep.mubr.bf16.mxu0 0
  %1317 = vmatmul.mubr.bf16.gmra.mrb[0].mxu0 %v902
  %v1318 = vpop.f32.mrb[0].mxu0
  %v1319 = vadd.f32 %v1186, %v1318
  %v1320 = vpop.f32.mrb[0].mxu0
  %v1321 = vadd.f32 %v1188, %v1320
  %v1322 = vpop.f32.mrb[0].mxu0
  %v1323 = vadd.f32 %v1190, %v1322
  %v1324 = vpop.f32.mrb[0].mxu0
  %v1325 = vadd.f32 %v1192, %v1324
  %1326 = vmatprep.mubr.bf16.mxu0 0
  %1327 = vmatmul.mubr.bf16.gmra.mrb[0].mxu0 %v907
  %v1328 = vpop.f32.mrb[0].mxu0
  %v1329 = vadd.f32 %v1196, %v1328
  %v1330 = vpop.f32.mrb[0].mxu0
  %v1331 = vadd.f32 %v1198, %v1330
  %v1332 = vpop.f32.mrb[0].mxu0
  %v1333 = vadd.f32 %v1200, %v1332
  %v1334 = vpop.f32.mrb[0].mxu0
  %v1335 = vadd.f32 %v1202, %v1334
  %1336 = vmatprep.mubr.bf16.mxu0 0
  %1337 = vmatmul.mubr.bf16.gmra.mrb[0].mxu0 %v912
  %v1338 = vpop.f32.mrb[0].mxu0
  %v1339 = vadd.f32 %v1206, %v1338
  %v1340 = vpop.f32.mrb[0].mxu0
  %v1341 = vadd.f32 %v1208, %v1340
  %v1342 = vpop.f32.mrb[0].mxu0
  %v1343 = vadd.f32 %v1210, %v1342
  %v1344 = vpop.f32.mrb[0].mxu0
  %v1345 = vadd.f32 %v1212, %v1344
  %1346 = vmatprep.mubr.bf16.mxu0 0
  %1347 = vmatmul.mubr.bf16.gmra.mrb[0].mxu0 %v917
  %v1348 = vpop.f32.mrb[0].mxu0
  %v1349 = vadd.f32 %v1216, %v1348
  %v1350 = vpop.f32.mrb[0].mxu0
  %v1351 = vadd.f32 %v1218, %v1350
  %v1352 = vpop.f32.mrb[0].mxu0
  %v1353 = vadd.f32 %v1220, %v1352
  %v1354 = vpop.f32.mrb[0].mxu0
  %v1355 = vadd.f32 %v1222, %v1354
  %1356 = vmatprep.mubr.bf16.mxu0 0
  %1357 = vmatmul.mubr.bf16.gmra.mrb[0].mxu0 %v922
  %v1358 = vpop.f32.mrb[0].mxu0
  %v1359 = vadd.f32 %v1226, %v1358
  %v1360 = vpop.f32.mrb[0].mxu0
  %v1361 = vadd.f32 %v1228, %v1360
  %v1362 = vpop.f32.mrb[0].mxu0
  %v1363 = vadd.f32 %v1230, %v1362
  %v1364 = vpop.f32.mrb[0].mxu0
  %v1365 = vadd.f32 %v1232, %v1364
  %1366 = vmatprep.mubr.bf16.mxu0 0
  %1367 = vmatmul.mubr.bf16.gmra.mrb[0].mxu0 %v927
  %v1368 = vpop.f32.mrb[0].mxu0
  %v1369 = vadd.f32 %v1236, %v1368
  %v1370 = vpop.f32.mrb[0].mxu0
  %v1371 = vadd.f32 %v1238, %v1370
  %v1372 = vpop.f32.mrb[0].mxu0
  %v1373 = vadd.f32 %v1240, %v1372
  %v1374 = vpop.f32.mrb[0].mxu0
  %v1375 = vadd.f32 %v1242, %v1374
  %1376 = vdwg.mxu0
  %v1377 = vpack.c.bf16 %v1283, %v1279
  %v1378 = vpack.c.bf16 %v1285, %v1281
  %v1379 = vpack.c.bf16 %v1293, %v1289
  %v1380 = vpack.c.bf16 %v1295, %v1291
  %v1381 = vpack.c.bf16 %v1303, %v1299
  %v1382 = vpack.c.bf16 %v1305, %v1301
  %v1383 = vpack.c.bf16 %v1313, %v1309
  %v1384 = vpack.c.bf16 %v1315, %v1311
  %v1385 = vpack.c.bf16 %v1323, %v1319
  %v1386 = vpack.c.bf16 %v1325, %v1321
  %v1387 = vpack.c.bf16 %v1333, %v1329
  %v1388 = vpack.c.bf16 %v1335, %v1331
  %v1389 = vpack.c.bf16 %v1343, %v1339
  %v1390 = vpack.c.bf16 %v1345, %v1341
  %v1391 = vpack.c.bf16 %v1353, %v1349
  %v1392 = vpack.c.bf16 %v1355, %v1351
  %v1393 = vpack.c.bf16 %v1363, %v1359
  %v1394 = vpack.c.bf16 %v1365, %v1361
  %v1395 = vpack.c.bf16 %v1373, %v1369
  %v1396 = vpack.c.bf16 %v1375, %v1371
  %v1417 = vunpack.c.l.b16 %v1377
  %v1418 = vunpack.c.l.b16 %v1378
  %v1419 = vunpack.c.h.b16 %v1377
  %v1420 = vunpack.c.h.b16 %v1378
  %v1421 = vunpack.c.l.b16 %v1379
  %v1422 = vunpack.c.l.b16 %v1380
  %v1423 = vunpack.c.h.b16 %v1379
  %v1424 = vunpack.c.h.b16 %v1380
  %v1425 = vunpack.c.l.b16 %v1381
  %v1426 = vunpack.c.l.b16 %v1382
  %v1427 = vunpack.c.h.b16 %v1381
  %v1428 = vunpack.c.h.b16 %v1382
  %v1429 = vunpack.c.l.b16 %v1383
  %v1430 = vunpack.c.l.b16 %v1384
  %v1431 = vunpack.c.h.b16 %v1383
  %v1432 = vunpack.c.h.b16 %v1384
  %v1433 = vunpack.c.l.b16 %v1385
  %v1434 = vunpack.c.l.b16 %v1386
  %v1435 = vunpack.c.h.b16 %v1385
  %v1436 = vunpack.c.h.b16 %v1386
  %v1437 = vunpack.c.l.b16 %v1387
  %v1438 = vunpack.c.l.b16 %v1388
  %v1439 = vunpack.c.h.b16 %v1387
  %v1440 = vunpack.c.h.b16 %v1388
  %v1441 = vunpack.c.l.b16 %v1389
  %v1442 = vunpack.c.l.b16 %v1390
  %v1443 = vunpack.c.h.b16 %v1389
  %v1444 = vunpack.c.h.b16 %v1390
  %v1445 = vunpack.c.l.b16 %v1391
  %v1446 = vunpack.c.l.b16 %v1392
  %v1447 = vunpack.c.h.b16 %v1391
  %v1448 = vunpack.c.h.b16 %v1392
  %v1449 = vunpack.c.l.b16 %v1393
  %v1450 = vunpack.c.l.b16 %v1394
  %v1451 = vunpack.c.h.b16 %v1393
  %v1452 = vunpack.c.h.b16 %v1394
  %v1453 = vunpack.c.l.b16 %v1395
  %v1454 = vunpack.c.l.b16 %v1396
  %v1455 = vunpack.c.h.b16 %v1395
  %v1456 = vunpack.c.h.b16 %v1396
  %v1457 = vpack.c.b16 %v1418, %v1417
  %v1458 = vpack.c.b16 %v1420, %v1419
  %v1459 = vpack.c.b16 %v1422, %v1421
  %v1460 = vpack.c.b16 %v1424, %v1423
  %v1461 = vpack.c.b16 %v1426, %v1425
  %v1462 = vpack.c.b16 %v1428, %v1427
  %v1463 = vpack.c.b16 %v1430, %v1429
  %v1464 = vpack.c.b16 %v1432, %v1431
  %v1465 = vpack.c.b16 %v1434, %v1433
  %v1466 = vpack.c.b16 %v1436, %v1435
  %v1467 = vpack.c.b16 %v1438, %v1437
  %v1468 = vpack.c.b16 %v1440, %v1439
  %v1469 = vpack.c.b16 %v1442, %v1441
  %v1470 = vpack.c.b16 %v1444, %v1443
  %v1471 = vpack.c.b16 %v1446, %v1445
  %v1472 = vpack.c.b16 %v1448, %v1447
  %v1473 = vpack.c.b16 %v1450, %v1449
  %v1474 = vpack.c.b16 %v1452, %v1451
  %v1475 = vpack.c.b16 %v1454, %v1453
  %v1476 = vpack.c.b16 %v1456, %v1455
  %vm1497 = vcmask 556036
  %vm1498 = vmor %vm1497, %vm134
  %1499 = vst.msk [vmem:[%s5] sm:$0xff] %vm1498, %v1457
  %1500 = vst.msk [vmem:[%s5 + $0x8] sm:$0xff] %vm1498, %v1458
  %1501 = vst.msk [vmem:[%s5 + $0x10] sm:$0xff] %vm1498, %v1459
  %1502 = vst.msk [vmem:[%s5 + $0x18] sm:$0xff] %vm1498, %v1460
  %1503 = vst.msk [vmem:[%s5 + $0x20] sm:$0xff] %vm1498, %v1461
  %1504 = vst.msk [vmem:[%s5 + $0x28] sm:$0xff] %vm1498, %v1462
  %1505 = vst.msk [vmem:[%s5 + $0x30] sm:$0xff] %vm1498, %v1463
  %1506 = vst.msk [vmem:[%s5 + $0x38] sm:$0xff] %vm1498, %v1464
  %1507 = vst.msk [vmem:[%s5 + $0x40] sm:$0xff] %vm1498, %v1465
  %1508 = vst.msk [vmem:[%s5 + $0x48] sm:$0xff] %vm1498, %v1466
  %1509 = vst.msk [vmem:[%s5 + $0x50] sm:$0xff] %vm1498, %v1467
  %1510 = vst.msk [vmem:[%s5 + $0x58] sm:$0xff] %vm1498, %v1468
  %1511 = vst.msk [vmem:[%s5 + $0x60] sm:$0xff] %vm1498, %v1469
  %1512 = vst.msk [vmem:[%s5 + $0x68] sm:$0xff] %vm1498, %v1470
  %1513 = vst.msk [vmem:[%s5 + $0x70] sm:$0xff] %vm1498, %v1471
  %1514 = vst.msk [vmem:[%s5 + $0x78] sm:$0xff] %vm1498, %v1472
  %1515 = vst.msk [vmem:[%s5 + $0x80] sm:$0xff] %vm1498, %v1473
  %1516 = vst.msk [vmem:[%s5 + $0x88] sm:$0xff] %vm1498, %v1474
  %1517 = vst.msk [vmem:[%s5 + $0x90] sm:$0xff] %vm1498, %v1475
  %1518 = vst.msk [vmem:[%s5 + $0x98] sm:$0xff] %vm1498, %v1476
  // Predicated region
  $region22: #{se_block.1} parent=0 // pred_check
    _
  $region23: #{se_block.1} parent=0 // pred_check_branch
    %1520 = sbr.rel (0) target = $region25
  $region24: #{se_block.1} parent=0 // pred_region
    _
  $region25: #{se_block.1} parent=0 // pred_fallthru
    _
  // Predicated region
  $region26: #{se_block.1} parent=0 // pred_check
    _
  $region27: #{se_block.1} parent=0 // pred_check_branch
    %1522 = sbr.rel (0) target = $region29
  $region28: #{se_block.1} parent=0 // pred_region
    _
  $region29: #{se_block.1} parent=0 // pred_fallthru
    _

</llo_original>
